<compile_context>
chip_gen: v6e
topology: v6e:2x2x1
jax: 0.10.0
libtpu: 0.0.40
codegen_flags: <defaults>
</compile_context>

<pallas_src>
import jax
import jax.numpy as jnp
from jax.experimental import pallas as pl
from jax.experimental.pallas import tpu as pltpu

_LANE = 128      # vreg lane width (fast / last axis)
_SUBLANE = 8     # vreg sublane width (second-to-last axis)
# Conservative per-kernel VMEM budget used for tile sizing; fits v5e's 16 MiB
# scoped default as well as v6e (32 MiB) and v7x (32 MiB scoped / 64 MiB phys).
_VMEM_BUDGET = 12 * 1024 * 1024


def _round_up(x, m):
    return ((x + m - 1) // m) * m


def _projection_kernel(h_ref, w_ref, b_ref, alpha_ref, o_ref):
    # Linear: (tm, D) @ (D, tn), f32 accumulation on the MXU.
    y = jnp.dot(h_ref[...], w_ref[...], preferred_element_type=jnp.float32)
    y = y + b_ref[...]                       # bias broadcast over rows (f32)
    # PReLU with the single shared parameter (nn.PReLU default
    # num_parameters=1); alpha lives in SMEM, no padded VMEM tile / extra DMA.
    a = alpha_ref[0]
    o_ref[...] = jnp.where(y > 0.0, y, a * y).astype(o_ref.dtype)


def _choose_tiles(N, D, itemsize):
    """Pick (tm, tn) row / column tiles from a conservative VMEM budget."""
    # Keep the whole (D, D) weight resident while its double-buffered copy is
    # modest; otherwise stream 512-lane column panels of it (a resident f32
    # weight stops fitting v7x's tighter VMEM around D ~ 2k).
    if 2 * D * D * itemsize <= _VMEM_BUDGET // 2:
        tn = D
    else:
        tn = 512
    resident = 2 * D * tn * itemsize + 2 * tn * 4          # weight + bias buffers
    per_row = 2 * (D + tn) * itemsize                      # h + out tiles, double-buffered
    avail = max(_VMEM_BUDGET - resident, per_row * _SUBLANE)
    tm = min(1024, avail // per_row)
    tm = max(_SUBLANE, (tm // _SUBLANE) * _SUBLANE)
    # Use >= 2 row tiles when N allows so both of v7x's TensorCores get work,
    # and never make the tile taller than the (sublane-rounded) row count.
    tm = min(tm,
             max(_SUBLANE, _round_up(-(-N // 2), _SUBLANE)),
             _round_up(N, _SUBLANE))
    return tm, tn


def projection_forward(h, w_io, b, alpha, *, tm=None, tn=None):
    """PReLU(h @ w_io + b) via a Pallas TPU kernel.

    h:     (N, D)  node embeddings (f32 or bf16)
    w_io:  (D, D)  linear weight already in (in_features, out_features) layout
                   and in h's dtype — convert ONCE with
                   `prepare_projection_params` (keeps the per-call transpose /
                   cast out of the memory-bound hot path).
    b:     (D,)    bias (float32)
    alpha: scalar  PReLU parameter (float32)
    """
    N, D = h.shape
    assert w_io.shape == (D, D) and b.shape == (D,)

    itemsize = jnp.dtype(h.dtype).itemsize
    auto_tm, auto_tn = _choose_tiles(N, D, itemsize)
    tm = auto_tm if tm is None else max(_SUBLANE, _round_up(tm, _SUBLANE))
    tn = auto_tn if tn is None else tn

    # No wrapper-side padding / slicing: Pallas clips partial edge blocks, so
    # rows >= N in the last input tile produce garbage that is simply never
    # stored (no cross-row reduction), and results for rows < N stay exact.
    grid = (pl.cdiv(N, tm), pl.cdiv(D, tn))

    b2d = b.astype(jnp.float32).reshape(1, D)
    alpha_arr = jnp.asarray(alpha, jnp.float32).reshape((1,))

    cost = pl.CostEstimate(
        flops=2 * N * D * D,
        transcendentals=0,
        bytes_accessed=(2 * N * D + D * D) * itemsize + 4 * D,
    )

    return pl.pallas_call(
        _projection_kernel,
        out_shape=jax.ShapeDtypeStruct((N, D), h.dtype),
        grid_spec=pltpu.PrefetchScalarGridSpec(
            num_scalar_prefetch=0,
            grid=grid,
            in_specs=[
                pl.BlockSpec((tm, D), lambda i, j: (i, 0)),   # h row tile (stays put over j)
                pl.BlockSpec((D, tn), lambda i, j: (0, j)),   # weight column panel
                pl.BlockSpec((1, tn), lambda i, j: (0, j)),   # bias slice
                pl.BlockSpec(memory_space=pltpu.MemorySpace.SMEM),  # alpha scalar
            ],
            out_specs=pl.BlockSpec((tm, tn), lambda i, j: (i, j)),
        ),
        compiler_params=pltpu.CompilerParams(
            dimension_semantics=("parallel", "parallel"),
        ),
        cost_estimate=cost,
    )(h, w_io, b2d, alpha_arr)


def prepare_projection_params(w, b, alpha, dtype=jnp.float32):
    """One-time conversion of torch-layout nn.Linear / nn.PReLU parameters.

    Transposes the (out, in) weight to (in, out) and casts it to the compute
    dtype here, OUTSIDE the per-call hot path (parameters are reused across
    forward calls, so this costs one D^2 copy total instead of one per call
    on a memory-bound kernel)."""
    w_io = jnp.asarray(w).T.astype(dtype)
    b = jnp.asarray(b, jnp.float32)
    alpha = jnp.asarray(alpha, jnp.float32)
    return w_io, b, alpha


def init_projection_params(key, latent_dim):
    """Deterministic init mimicking nn.Linear (uniform +-1/sqrt(D), torch
    (out, in) layout) and nn.PReLU (alpha = 0.25)."""
    kw, kb = jax.random.split(key)
    bound = 1.0 / (latent_dim ** 0.5)
    w = jax.random.uniform(kw, (latent_dim, latent_dim), jnp.float32, -bound, bound)
    b = jax.random.uniform(kb, (latent_dim,), jnp.float32, -bound, bound)
    alpha = jnp.float32(0.25)
    return w, b, alpha


def _reference(h, w, b, alpha):
    y = h @ w.T + b
    return jnp.where(y > 0, y, alpha * y)


if __name__ == "__main__":
    key = jax.random.PRNGKey(0)
    k_in, k_par, k_in2, k_par2 = jax.random.split(key, 4)

    # Small demo consistent with the module: 8 node embeddings, latent_dim=32.
    N, latent_dim = 8, 32
    h = jax.random.normal(k_in, (N, latent_dim), jnp.float32)
    w, b, alpha = init_projection_params(k_par, latent_dim)

    w_io, b_p, alpha_p = prepare_projection_params(w, b, alpha)
    out = jax.block_until_ready(projection_forward(h, w_io, b_p, alpha_p))
    ref = _reference(h, w, b, alpha)
    assert out.shape == (N, latent_dim) and out.dtype == h.dtype
    assert jnp.allclose(out, ref, atol=1e-5, rtol=1e-5), "f32 mismatch vs reference"

    # Ragged shapes (N not a multiple of the row tile, D not a multiple of 128)
    # exercise the no-pad partial-block path with clipped edge stores.
    N2, latent_dim2 = 29, 48
    h2 = jax.random.normal(k_in2, (N2, latent_dim2), jnp.float32)
    w2, b2, alpha2 = init_projection_params(k_par2, latent_dim2)
    w2_io, b2_p, alpha2_p = prepare_projection_params(w2, b2, alpha2)
    out2 = jax.block_until_ready(projection_forward(h2, w2_io, b2_p, alpha2_p))
    ref2 = _reference(h2, w2, b2, alpha2)
    assert out2.shape == (N2, latent_dim2)
    assert jnp.allclose(out2, ref2, atol=1e-5, rtol=1e-5), "ragged mismatch"

    # Optional bf16 path: halves HBM traffic on the memory-bound op when the
    # caller already holds bf16 activations (MXU still accumulates in f32,
    # bias + PReLU stay in f32).
    h_bf16 = h.astype(jnp.bfloat16)
    w_io_bf16, _, _ = prepare_projection_params(w, b, alpha, dtype=jnp.bfloat16)
    out_bf16 = jax.block_until_ready(
        projection_forward(h_bf16, w_io_bf16, b_p, alpha_p))
    ref_bf16 = _reference(h_bf16.astype(jnp.float32),
                          w_io_bf16.astype(jnp.float32).T, b, alpha)
    assert out_bf16.dtype == jnp.bfloat16
    assert jnp.allclose(out_bf16.astype(jnp.float32), ref_bf16,
                        atol=3e-2, rtol=3e-2), "bf16 mismatch"

    print("KERNEL_OK")
</pallas_src>

<mosaic_0001>
module attributes {stable_mosaic.version = 11 : i64} {
  func.func @_projection_kernel(%arg0: i32, %arg1: i32, %arg2: memref<8x32xf32, #tpu.memory_space<vmem>>, %arg3: memref<32x32xf32, #tpu.memory_space<vmem>>, %arg4: memref<1x32xf32, #tpu.memory_space<vmem>>, %arg5: memref<1xf32, #tpu.memory_space<smem>>, %arg6: memref<8x32xf32, #tpu.memory_space<vmem>>) attributes {dimension_semantics = [#tpu.dimension_semantics<parallel>, #tpu.dimension_semantics<parallel>], iteration_bounds = array<i64: 1, 1>, scalar_prefetch = 0 : i64, scratch_operands = 0 : i64, tpu.core_type = #tpu.core_type<tc>, window_params = [{transform_indices = @transform_0, window_bounds = array<i64: 8, 32>}, {transform_indices = @transform_1, window_bounds = array<i64: 32, 32>}, {transform_indices = @transform_2, window_bounds = array<i64: 1, 32>}, {transform_indices = @transform_3, window_bounds = array<i64: 1>}, {transform_indices = @transform_4, window_bounds = array<i64: 8, 32>}]} {
    %c0 = arith.constant 0 : index
    %c0_0 = arith.constant 0 : index
    %0 = vector.load %arg2[%c0, %c0_0] : memref<8x32xf32, #tpu.memory_space<vmem>>, vector<8x32xf32>
    %c0_1 = arith.constant 0 : index
    %c0_2 = arith.constant 0 : index
    %1 = vector.load %arg3[%c0_1, %c0_2] : memref<32x32xf32, #tpu.memory_space<vmem>>, vector<32x32xf32>
    %cst = arith.constant dense<0.000000e+00> : vector<8x32xf32>
    %2 = tpu.matmul %0, %1, %cst {dimension_numbers = #tpu.dot_dimension_numbers<[1], [0], [0], [1], [0, 0, 1, 1], [], []>} : vector<8x32xf32>, vector<32x32xf32>, vector<8x32xf32> -> vector<8x32xf32>
    %c0_3 = arith.constant 0 : index
    %c0_4 = arith.constant 0 : index
    %3 = vector.load %arg4[%c0_3, %c0_4] : memref<1x32xf32, #tpu.memory_space<vmem>>, vector<1x32xf32>
    %4 = vector.broadcast %3 : vector<1x32xf32> to vector<8x32xf32>
    %5 = arith.addf %2, %4 : vector<8x32xf32>
    %c0_5 = arith.constant 0 : index
    %6 = memref.load %arg5[%c0_5] : memref<1xf32, #tpu.memory_space<smem>>
    %cst_6 = arith.constant 0.000000e+00 : f32
    %7 = vector.broadcast %cst_6 : f32 to vector<8x32xf32>
    %8 = arith.cmpf ogt, %5, %7 : vector<8x32xf32>
    %9 = vector.broadcast %6 : f32 to vector<8x32xf32>
    %10 = arith.mulf %9, %5 : vector<8x32xf32>
    %11 = arith.select %8, %5, %10 : vector<8x32xi1>, vector<8x32xf32>
    %c0_7 = arith.constant 0 : index
    %c0_8 = arith.constant 0 : index
    %12 = vector.load %arg6[%c0_7, %c0_8] : memref<8x32xf32, #tpu.memory_space<vmem>>, vector<8x32xf32>
    tpu.vector_store %arg6[%c0_7, %c0_8], %11 {strides = array<i32>} : memref<8x32xf32, #tpu.memory_space<vmem>>, vector<8x32xf32>,
    return
  }
  func.func @transform_0(%arg0: i32, %arg1: i32) -> (i32, i32) {
    %c0_i32 = arith.constant 0 : i32
    %c0_i32_0 = arith.constant 0 : i32
    return %arg0, %c0_i32 : i32, i32
  }
  func.func @transform_1(%arg0: i32, %arg1: i32) -> (i32, i32) {
    %c0_i32 = arith.constant 0 : i32
    %c0_i32_0 = arith.constant 0 : i32
    return %c0_i32, %arg1 : i32, i32
  }
  func.func @transform_2(%arg0: i32, %arg1: i32) -> (i32, i32) {
    %c0_i32 = arith.constant 0 : i32
    %c0_i32_0 = arith.constant 0 : i32
    return %c0_i32, %arg1 : i32, i32
  }
  func.func @transform_3(%arg0: i32, %arg1: i32) -> i32 {
    %c0_i32 = arith.constant 0 : i32
    %c0_i32_0 = arith.constant 0 : i32
    return %c0_i32 : i32
  }
  func.func @transform_4(%arg0: i32, %arg1: i32) -> (i32, i32) {
    %c0_i32 = arith.constant 0 : i32
    return %arg0, %arg1 : i32, i32
  }
}

</mosaic_0001>

<llo_original>
// kernel: tpu_custom_call.1
$region0: #{tpu_custom_call.1}
  #allocation0 [shape = 'u32[]', space=smem, size = 0x4, offset = 0x4, fixed_abs, tag = 'smem constant byte address 0x4 - core index']
  #allocation1 [shape = 'u32[144,128]{1,0:T(1,128)}', space=vmem, size = 0x12000, scoped, tag = 'internal scratch']
  #allocation2 [shape = 'f32[1]{0:T(128)S(6)}', space=smem, size = 0x200, scoped, tag = 'scoped memory for tpu_custom_call.1']
  %s0 = inlined_call_operand.hbm [shape: f32[8,32], index: 0, kind: input, shape index: {}]
  %s1 = inlined_call_operand.hbm [shape: f32[32,32], index: 1, kind: input, shape index: {}]
  %s2 = inlined_call_operand.vmem [shape: f32[1,32], index: 2, kind: input, shape index: {}]
  %s3 = inlined_call_operand.<no memory space> [shape: f32[1], index: 3, kind: input, shape index: {}]
  %s4 = inlined_call_operand.hbm [shape: f32[8,32], index: 4, kind: output, shape index: {}]
  %s5 = sld [smem:[#allocation0]]
  $region34: #{tpu_custom_call.1} parent=0
    _
  %s7 = ssub.s32 1, %s5
  %s8 = scalar_select 0, %s7, %s5
  %9 = sst [smem:[#allocation2]] %s3
  $region1: #{tpu_custom_call.1} parent=0
    #allocation3 [shape = 'u8[4096]{0}', space=vmem, size = 0x1000, scoped, tag = 'input window, operand 0, single buffered']
    #allocation4 [shape = 's32[1]{0}', space=sflag, size = 0x4, scoped, tag = 'scoped memory for tpu_custom_call.1']
    #allocation5 [shape = 's32[1]{0}', space=sflag, size = 0x4, scoped, tag = 'scoped memory for tpu_custom_call.1']
    #allocation6 [shape = 'u8[16384]{0}', space=vmem, size = 0x4000, scoped, tag = 'input window, operand 1, single buffered']
    #allocation7 [shape = 's32[1]{0}', space=sflag, size = 0x4, scoped, tag = 'scoped memory for tpu_custom_call.1']
    #allocation8 [shape = 'u8[4096]{0}', space=vmem, size = 0x1000, scoped, tag = 'output window, operand 0, single buffered']
    %10 = vsyncpa [#allocation4], 0
    %11 = vsyncpa [#allocation7], 0
    %12 = vsyncpa [#allocation5], 0
    // Predicated region
    $region2: #{tpu_custom_call.1} parent=1 // pred_check
      _
    $region3: #{tpu_custom_call.1} parent=1 // pred_check_branch
      %14 = sbr.rel (0) target = $region5
    $region4: #{tpu_custom_call.1} parent=1 // pred_region
      %s16 = ssub.s32 128, 128
      %17 = vsyncadd [#allocation4], %s16
      %s19 = sshll.u32 [#allocation3], 4
      %s20 = int_to_ptr.vmem [resolvable:$true] %s19
      %22 = dma.hbm_to_vmem [thread:$0]  %s0, 128, %s20, [#allocation4]
    $region5: #{tpu_custom_call.1} parent=1 // pred_fallthru
      _
    // Predicated region
    $region6: #{tpu_custom_call.1} parent=1 // pred_check
      _
    $region7: #{tpu_custom_call.1} parent=1 // pred_check_branch
      %24 = sbr.rel (0) target = $region9
    $region8: #{tpu_custom_call.1} parent=1 // pred_region
      %s26 = ssub.s32 512, 512
      %27 = vsyncadd [#allocation7], %s26
      %s28 = sshll.u32 [#allocation6], 4
      %s29 = int_to_ptr.vmem [resolvable:$true] %s28
      %34 = dma.hbm_to_vmem [thread:$0]  %s1, 512, %s29, [#allocation7], 128, 128, 8
    $region9: #{tpu_custom_call.1} parent=1 // pred_fallthru
      _
    // Predicated region
    $region10: #{tpu_custom_call.1} parent=1 // pred_check
      _
    $region11: #{tpu_custom_call.1} parent=1 // pred_check_branch
      %36 = sbr.rel (0) target = $region13
    $region12: #{tpu_custom_call.1} parent=1 // pred_region
      _
    $region13: #{tpu_custom_call.1} parent=1 // pred_fallthru
      _
    // Predicated region
    $region14: #{tpu_custom_call.1} parent=1 // pred_check
      _
    $region15: #{tpu_custom_call.1} parent=1 // pred_check_branch
      %38 = sbr.rel (0) target = $region17
    $region16: #{tpu_custom_call.1} parent=1 // pred_region
      _
    $region17: #{tpu_custom_call.1} parent=1 // pred_fallthru
      _
    // Predicated region
    $region18: #{tpu_custom_call.1} parent=1 // pred_check
      _
    $region19: #{tpu_custom_call.1} parent=1 // pred_check_branch
      %40 = sbr.rel (0) target = $region21
    $region20: #{tpu_custom_call.1} parent=1 // pred_region
      %41 = dma.done [#allocation4], 128
    $region21: #{tpu_custom_call.1} parent=1 // pred_fallthru
      _
    // Predicated region
    $region22: #{tpu_custom_call.1} parent=1 // pred_check
      _
    $region23: #{tpu_custom_call.1} parent=1 // pred_check_branch
      %43 = sbr.rel (0) target = $region25
    $region24: #{tpu_custom_call.1} parent=1 // pred_region
      %44 = dma.done [#allocation7], 512
    $region25: #{tpu_custom_call.1} parent=1 // pred_fallthru
      _
    %v45 = vld [vmem:[#allocation3] sm:$0xff]
    %v46 = vld [vmem:[#allocation6] sm:$0xff]
    %v47 = vld [vmem:[#allocation6 + $0x8] sm:$0xff]
    %v48 = vld [vmem:[#allocation6 + $0x10] sm:$0xff]
    %v49 = vld [vmem:[#allocation6 + $0x18] sm:$0xff]
    %v50 = vld [vmem:[%s2] sm:$0x1]
    %v52 = vlaneseq
    %v53 = vshrl.u32 %v52, 7
    %v54 = vsub.s32 0, %v53
    %v55 = vrot.slane %v50, %v54
    %vm57 = vcmask 261120
    %v59 = vsel %vm57, %v45, 0
    %61 = vmatprep.subr.mxu0 0.0
    %62 = vmatpush1.msra.mxu0 0.0
    %63 = vmatprep.subr.mxu0 0.0
    %64 = vmatpush1.msra.mxu0 0.0
    %65 = vmatprep.subr.mxu0 0.0
    %66 = vmatpush1.msra.mxu0 0.0
    %67 = vmatprep.subr.mxu0 0.0
    %68 = vmatpush1.msra.mxu0 0.0
    %69 = vmatprep.subr.mxu0 0.0
    %70 = vmatpush1.msra.mxu0 0.0
    %71 = vmatprep.subr.mxu0 0.0
    %72 = vmatpush1.msra.mxu0 0.0
    %73 = vmatprep.subr.mxu0 0.0
    %74 = vmatpush1.msra.mxu0 0.0
    %75 = vmatprep.subr.mxu0 0.0
    %76 = vmatpush1.msra.mxu0 0.0
    %77 = vmatprep.subr.mxu0 0.0
    %78 = vmatpush1.msra.mxu0 0.0
    %79 = vmatprep.subr.mxu0 0.0
    %80 = vmatpush1.msra.mxu0 0.0
    %81 = vmatprep.subr.mxu0 0.0
    %82 = vmatpush1.msra.mxu0 0.0
    %83 = vmatprep.subr.mxu0 0.0
    %84 = vmatpush1.msra.mxu0 0.0
    %85 = vmatprep.subr.mxu0 0.0
    %86 = vmatpush1.msra.mxu0 %v49
    %87 = vmatprep.subr.mxu0 0.0
    %88 = vmatpush1.msra.mxu0 %v48
    %89 = vmatprep.subr.mxu0 0.0
    %90 = vmatpush1.msra.mxu0 %v47
    %91 = vmatprep.subr.mxu0 0.0
    %92 = vmatpush1.msra.mxu0 %v46
    %93 = vmatprep.subr.mxu0 0.0
    %94 = vmatpush2.msra.mxu0 0.0
    %95 = vmatprep.subr.mxu0 0.0
    %96 = vmatpush2.msra.mxu0 0.0
    %97 = vmatprep.subr.mxu0 0.0
    %98 = vmatpush2.msra.mxu0 0.0
    %99 = vmatprep.subr.mxu0 0.0
    %100 = vmatpush2.msra.mxu0 0.0
    %101 = vmatprep.subr.mxu0 0.0
    %102 = vmatpush2.msra.mxu0 0.0
    %103 = vmatprep.subr.mxu0 0.0
    %104 = vmatpush2.msra.mxu0 0.0
    %105 = vmatprep.subr.mxu0 0.0
    %106 = vmatpush2.msra.mxu0 0.0
    %107 = vmatprep.subr.mxu0 0.0
    %108 = vmatpush2.msra.mxu0 0.0
    %109 = vmatprep.subr.mxu0 0.0
    %110 = vmatpush2.msra.mxu0 0.0
    %111 = vmatprep.subr.mxu0 0.0
    %112 = vmatpush2.msra.mxu0 0.0
    %113 = vmatprep.subr.mxu0 0.0
    %114 = vmatpush2.msra.mxu0 0.0
    %115 = vmatprep.subr.mxu0 0.0
    %116 = vmatpush2.msra.mxu0 0.0
    %117 = vmatprep.subr.mxu0 0.0
    %118 = vmatpush2.msra.mxu0 0.0
    %119 = vmatprep.subr.mxu0 0.0
    %120 = vmatpush2.msra.mxu0 0.0
    %121 = vmatprep.subr.mxu0 0.0
    %122 = vmatpush2.msra.mxu0 0.0
    %123 = vmatprep.subr.mxu0 0.0
    %124 = vmatpush2.msra.mxu0 0.0
    %125 = vmatprep.mubr.f32.mxu0 0.0
    %126 = vmatmul.mubr.f32.gmra.mxu0 %v59
    %v127 = vpop.f32.mrf.mxu0
    %v128 = vadd.f32 %v55, %v127
    %v129 = vpop.f32.mrf.mxu0
    %130 = vdwg.mxu0
    %s131 = sld [smem:[#allocation2]]
    %vm132 = vcmp.gt.f32.partialorder %v128, 0.0
    %v133 = vstv %s131
    %v134 = vmul.f32 %v133, %v128
    %v135 = vsel %vm132, %v128, %v134
    %136 = vst.msk [vmem:[#allocation8] sm:$0xff] %vm57, %v135
    // Predicated region
    $region26: #{tpu_custom_call.1} parent=1 // pred_check
      _
    $region27: #{tpu_custom_call.1} parent=1 // pred_check_branch
      %138 = sbr.rel (0) target = $region29
    $region28: #{tpu_custom_call.1} parent=1 // pred_region
      %s140 = ssub.s32 128, 128
      %141 = vsyncadd [#allocation5], %s140
      %s143 = sshll.u32 [#allocation8], 4
      %s144 = int_to_ptr.vmem [resolvable:$true] %s143
      %146 = dma.vmem_to_hbm [thread:$0]  %s144, 128, %s4, [#allocation5]
    $region29: #{tpu_custom_call.1} parent=1 // pred_fallthru
      _
    // Predicated region
    $region30: #{tpu_custom_call.1} parent=1 // pred_check
      _
    $region31: #{tpu_custom_call.1} parent=1 // pred_check_branch
      %148 = sbr.rel (0) target = $region33
    $region32: #{tpu_custom_call.1} parent=1 // pred_region
      %149 = dma.done [#allocation5], 128
    $region33: #{tpu_custom_call.1} parent=1 // pred_fallthru
      _
    %150 = vsyncpa [#allocation4], 1
    %151 = vsyncpa [#allocation7], 1
    %152 = vsyncpa [#allocation5], 1

</llo_original>
